<compile_context>
chip_gen: v6e
topology: v6e:2x2x1
jax: 0.10.0
libtpu: 0.0.40
codegen_flags: <defaults>
</compile_context>

<pallas_src>
import math

import jax
import jax.numpy as jnp
from jax import lax
from jax.experimental import pallas as pl
from jax.experimental.pallas import tpu as pltpu


def _round_up(x, m):
    return ((x + m - 1) // m) * m


def _balanced_tile(dim, max_tile, align):
    """Largest aligned tile <= max_tile that evenly balances ceil(dim/max_tile) tiles
    (avoids near-half-empty last tiles)."""
    max_tile = _round_up(max_tile, align)
    dim_aligned = _round_up(dim, align)
    if dim_aligned <= max_tile:
        return dim_aligned
    n_tiles = -(-dim // max_tile)                    # ceil
    return _round_up(-(-dim // n_tiles), align)      # <= max_tile by construction


def _make_relora_kernel(acc_in_out: bool):
    """acc_in_out=True: output dtype is f32, use o_ref itself as the K accumulator."""

    def kernel(x_ref, w_ref, b_ref, a_ref, bw_ref, o_ref, *scratch):
        # x_ref : (tm, tk)   row/K tile of the flattened input
        # w_ref : (tn, tk)   frozen base weight tile (torch (out, in) layout)
        # b_ref : (1, tn)    bias tile
        # a_ref : (rp, tk)   lora_A tile (rank zero-padded to rp=128)
        # bw_ref: (tn, rp)   lora_B tile (scaling pre-folded, rank padded)
        # o_ref : (tm, tn)   output tile (doubles as accumulator when f32)
        if acc_in_out:
            (xa_ref,) = scratch
            acc_ref = o_ref
        else:
            acc_ref, xa_ref = scratch

        j = pl.program_id(1)
        k = pl.program_id(2)

        @pl.when(k == 0)
        def _():
            acc_ref[...] = jnp.zeros_like(acc_ref)

        # xa is shared across all N tiles of the same M tile: init only at (j=0, k=0).
        @pl.when((k == 0) & (j == 0))
        def _():
            xa_ref[...] = jnp.zeros_like(xa_ref)

        x = x_ref[...]

        # Base path partial sum: x (tm, tk) contracted with W (tn, tk) on K == (x @ W^T).
        acc_ref[...] += lax.dot_general(
            x, w_ref[...], (((1,), (1,)), ((), ())),
            preferred_element_type=jnp.float32)

        # LoRA first matmul (x @ A^T): only on the first N sweep, reused for all later j.
        # TODO(synk): lora_dropout (p=0.1) is identity in eval mode; training dropout omitted.
        @pl.when(j == 0)
        def _():
            xa_ref[...] += lax.dot_general(
                x, a_ref[...], (((1,), (1,)), ((), ())),
                preferred_element_type=jnp.float32)

        @pl.when(k == pl.num_programs(2) - 1)
        def _():
            # LoRA second matmul: (tm, rp) @ B^T tile -> (tm, tn).  Cast xa DOWN to B's
            # dtype (no f32 up-cast of the weight); f32 MXU accumulation.
            xab = lax.dot_general(
                xa_ref[...].astype(bw_ref.dtype), bw_ref[...],
                (((1,), (1,)), ((), ())),
                preferred_element_type=jnp.float32)
            result = acc_ref[...] + b_ref[...].astype(jnp.float32) + xab
            o_ref[...] = result.astype(o_ref.dtype)

    return kernel


def relora_linear(x, weight, bias, lora_A_w, lora_B_w, *, lora_alpha=1,
                  tm=512, tn=512, tk=512, compute_dtype=None):
    """ReLoRaLinear forward.

    x: (..., in), weight: (out, in), bias: (out,) or None,
    lora_A_w: (r, in), lora_B_w: (out, r).
    compute_dtype: optional MXU operand dtype (e.g. jnp.bfloat16 on v5e); f32 accumulation
    and the output dtype (== x.dtype) are unchanged.
    """
    out_features, in_features = weight.shape
    r = lora_A_w.shape[0]
    scaling = float(lora_alpha) / float(r)

    out_dtype = x.dtype
    orig_lead = x.shape[:-1]
    xm = x.reshape(-1, in_features)
    M = xm.shape[0]

    if bias is None:
        bias = jnp.zeros((out_features,), dtype=out_dtype)

    # Fold the (non-trainable) scaling into lora_B in f32, cast back once.
    bw_scaled = (lora_B_w.astype(jnp.float32) * scaling).astype(lora_B_w.dtype)

    if compute_dtype is not None:
        xm = xm.astype(compute_dtype)
        weight = weight.astype(compute_dtype)
        lora_A_w = lora_A_w.astype(compute_dtype)
        bw_scaled = bw_scaled.astype(compute_dtype)

    # ---- shape-aware, aligned, balanced tile selection ----
    x_itemsize = jnp.dtype(xm.dtype).itemsize
    sub_align = max(8, 32 // x_itemsize)            # f32:8, bf16:16, int8/fp8:32
    lane_align_n = 256 if max(tn, out_features) > 128 else 128
    lane_align_k = 256 if max(tk, in_features) > 128 else 128

    tm = _balanced_tile(M, tm, sub_align)
    tn = _balanced_tile(out_features, tn, lane_align_n)
    tk = _balanced_tile(in_features, tk, lane_align_k)
    rp = _round_up(r, 128)                          # lane-dense LoRA rank

    Mp = _round_up(M, tm)
    Np = _round_up(out_features, tn)
    Kp = _round_up(in_features, tk)

    # Zero padding is exact: padded K columns / rank columns contribute nothing;
    # padded N columns (zero W rows / zero bias) are sliced off at the end.
    xm_p = jnp.pad(xm, ((0, Mp - M), (0, Kp - in_features)))
    w_p = jnp.pad(weight, ((0, Np - out_features), (0, Kp - in_features)))
    b_p = jnp.pad(bias.reshape(1, -1), ((0, 0), (0, Np - out_features)))
    a_p = jnp.pad(lora_A_w, ((0, rp - r), (0, Kp - in_features)))
    bw_p = jnp.pad(bw_scaled, ((0, Np - out_features), (0, rp - r)))

    grid = (Mp // tm, Np // tn, Kp // tk)
    acc_in_out = (jnp.dtype(out_dtype) == jnp.dtype(jnp.float32))

    scratch_shapes = []
    if not acc_in_out:
        scratch_shapes.append(pltpu.VMEM((tm, tn), jnp.float32))   # base+LoRA accumulator
    scratch_shapes.append(pltpu.VMEM((tm, rp), jnp.float32))       # x @ A^T accumulator

    # VMEM budget from the actual double-buffered footprint (+50% / +4 MiB headroom),
    # capped below v7x's 64 MiB per-core physical VMEM.
    def _b(shape, dt):
        return math.prod(shape) * jnp.dtype(dt).itemsize
    footprint = 2 * (_b((tm, tk), xm_p.dtype) + _b((tn, tk), w_p.dtype)
                     + _b((1, tn), b_p.dtype) + _b((rp, tk), a_p.dtype)
                     + _b((tn, rp), bw_p.dtype) + _b((tm, tn), out_dtype))
    footprint += _b((tm, rp), jnp.float32)
    if not acc_in_out:
        footprint += _b((tm, tn), jnp.float32)
    vmem_limit = int(min(max(footprint * 3 // 2 + (4 << 20), 16 << 20), 60 << 20))

    out = pl.pallas_call(
        _make_relora_kernel(acc_in_out),
        out_shape=jax.ShapeDtypeStruct((Mp, Np), out_dtype),
        grid_spec=pltpu.PrefetchScalarGridSpec(
            num_scalar_prefetch=0,
            grid=grid,
            in_specs=[
                pl.BlockSpec((tm, tk), lambda i, j, k: (i, k)),   # x tile
                pl.BlockSpec((tn, tk), lambda i, j, k: (j, k)),   # W tile
                pl.BlockSpec((1, tn), lambda i, j, k: (0, j)),    # bias tile
                pl.BlockSpec((rp, tk), lambda i, j, k: (0, k)),   # lora_A tile
                pl.BlockSpec((tn, rp), lambda i, j, k: (j, 0)),   # lora_B (scaled) tile
            ],
            out_specs=pl.BlockSpec((tm, tn), lambda i, j, k: (i, j)),
            scratch_shapes=scratch_shapes,
        ),
        compiler_params=pltpu.CompilerParams(
            # j must NOT be sharded across cores (xa scratch reuse across N tiles);
            # only the M axis is parallel -> safe on v7x's 2 TCs, no-op on v5e/v6e.
            dimension_semantics=("parallel", "arbitrary", "arbitrary"),
            vmem_limit_bytes=vmem_limit,
        ),
    )(xm_p, w_p, b_p, a_p, bw_p)

    out = out[:M, :out_features]
    return out.reshape(*orig_lead, out_features)


if __name__ == "__main__":
    # Small shapes consistent with the module's forward: (batch, seq, in_features).
    batch, seq = 2, 12
    in_features, out_features, r = 256, 200, 8
    lora_alpha = 32

    key = jax.random.PRNGKey(0)
    kx, kw, kb, ka, kbw = jax.random.split(key, 5)

    x = jax.random.normal(kx, (batch, seq, in_features), dtype=jnp.float32)
    # weight: (out, in) frozen base weight; bias: (out,)
    # lora_A.weight: (r, in); lora_B.weight: (out, r) -- torch init is zeros, use small
    # random values so the LoRA path is exercised numerically.
    weight = jax.random.normal(kw, (out_features, in_features), dtype=jnp.float32) * 0.05
    bias = jax.random.normal(kb, (out_features,), dtype=jnp.float32) * 0.01
    a_bound = 1.0 / math.sqrt(in_features)
    lora_A_w = jax.random.uniform(ka, (r, in_features), dtype=jnp.float32,
                                  minval=-a_bound, maxval=a_bound)
    lora_B_w = jax.random.normal(kbw, (out_features, r), dtype=jnp.float32) * 0.02

    # Pure-JAX reference (eval mode: dropout = identity).
    scaling = lora_alpha / r
    ref = x @ weight.T + bias + ((x @ lora_A_w.T) @ lora_B_w.T) * scaling

    # 1) Small tiles: forces a (2, 2, 2) grid -> exercises K accumulation, the j==0
    #    xa-reuse path, rank padding, and M/N padding.
    out_small = relora_linear(x, weight, bias, lora_A_w, lora_B_w,
                              lora_alpha=lora_alpha, tm=16, tn=128, tk=128)
    out_small = jax.block_until_ready(out_small)
    assert out_small.shape == (batch, seq, out_features)
    err = float(jnp.max(jnp.abs(out_small - ref)))
    assert jnp.allclose(out_small, ref, atol=2e-5, rtol=2e-5), err

    # 2) Default (large, balanced) tiles: single-tile grid path.
    out_big = relora_linear(x, weight, bias, lora_A_w, lora_B_w, lora_alpha=lora_alpha)
    out_big = jax.block_until_ready(out_big)
    err = float(jnp.max(jnp.abs(out_big - ref)))
    assert jnp.allclose(out_big, ref, atol=2e-5, rtol=2e-5), err

    print("KERNEL_OK")
</pallas_src>

<mosaic_0001>
module attributes {stable_mosaic.version = 11 : i64} {
  func.func @kernel(%arg0: i32, %arg1: i32, %arg2: i32, %arg3: memref<16x256xf32, #tpu.memory_space<vmem>>, %arg4: memref<256x256xf32, #tpu.memory_space<vmem>>, %arg5: memref<1x256xf32, #tpu.memory_space<vmem>>, %arg6: memref<128x256xf32, #tpu.memory_space<vmem>>, %arg7: memref<256x128xf32, #tpu.memory_space<vmem>>, %arg8: memref<16x256xf32, #tpu.memory_space<vmem>>, %arg9: memref<16x128xf32, #tpu.memory_space<vmem>>) attributes {dimension_semantics = [#tpu.dimension_semantics<parallel>, #tpu.dimension_semantics<arbitrary>, #tpu.dimension_semantics<arbitrary>], iteration_bounds = array<i64: 2, 1, 1>, scalar_prefetch = 0 : i64, scratch_operands = 1 : i64, tpu.core_type = #tpu.core_type<tc>, window_params = [{transform_indices = @transform_0, window_bounds = array<i64: 16, 256>}, {transform_indices = @transform_1, window_bounds = array<i64: 256, 256>}, {transform_indices = @transform_2, window_bounds = array<i64: 1, 256>}, {transform_indices = @transform_3, window_bounds = array<i64: 128, 256>}, {transform_indices = @transform_4, window_bounds = array<i64: 256, 128>}, {transform_indices = @transform_5, window_bounds = array<i64: 16, 256>}]} {
    %c0_i32 = arith.constant 0 : i32
    %0 = arith.cmpi eq, %arg2, %c0_i32 : i32
    %1 = arith.extui %0 : i1 to i32
    %c0_i32_0 = arith.constant 0 : i32
    %2 = arith.cmpi ne, %1, %c0_i32_0 : i32
    scf.if %2 {
      %cst_15 = arith.constant 0.000000e+00 : f32
      %20 = vector.broadcast %cst_15 : f32 to vector<16x256xf32>
      %c0_16 = arith.constant 0 : index
      %c0_17 = arith.constant 0 : index
      %21 = vector.load %arg8[%c0_16, %c0_17] : memref<16x256xf32, #tpu.memory_space<vmem>>, vector<16x256xf32>
      tpu.vector_store %arg8[%c0_16, %c0_17], %20 {strides = array<i32>} : memref<16x256xf32, #tpu.memory_space<vmem>>, vector<16x256xf32>,
    } else {
    }
    %c0_i32_1 = arith.constant 0 : i32
    %3 = arith.cmpi eq, %arg2, %c0_i32_1 : i32
    %c0_i32_2 = arith.constant 0 : i32
    %4 = arith.cmpi eq, %arg1, %c0_i32_2 : i32
    %5 = arith.andi %3, %4 : i1
    %6 = arith.extui %5 : i1 to i32
    %c0_i32_3 = arith.constant 0 : i32
    %7 = arith.cmpi ne, %6, %c0_i32_3 : i32
    scf.if %7 {
      %cst_15 = arith.constant 0.000000e+00 : f32
      %20 = vector.broadcast %cst_15 : f32 to vector<16x128xf32>
      %c0_16 = arith.constant 0 : index
      %c0_17 = arith.constant 0 : index
      %21 = vector.load %arg9[%c0_16, %c0_17] : memref<16x128xf32, #tpu.memory_space<vmem>>, vector<16x128xf32>
      tpu.vector_store %arg9[%c0_16, %c0_17], %20 {strides = array<i32>} : memref<16x128xf32, #tpu.memory_space<vmem>>, vector<16x128xf32>,
    } else {
    }
    %c0 = arith.constant 0 : index
    %c0_4 = arith.constant 0 : index
    %8 = vector.load %arg3[%c0, %c0_4] : memref<16x256xf32, #tpu.memory_space<vmem>>, vector<16x256xf32>
    %c0_5 = arith.constant 0 : index
    %c0_6 = arith.constant 0 : index
    %9 = vector.load %arg8[%c0_5, %c0_6] : memref<16x256xf32, #tpu.memory_space<vmem>>, vector<16x256xf32>
    %c0_7 = arith.constant 0 : index
    %c0_8 = arith.constant 0 : index
    %10 = vector.load %arg4[%c0_7, %c0_8] : memref<256x256xf32, #tpu.memory_space<vmem>>, vector<256x256xf32>
    %cst = arith.constant dense<0.000000e+00> : vector<16x256xf32>
    %11 = tpu.matmul %8, %10, %cst {dimension_numbers = #tpu.dot_dimension_numbers<[1], [1], [0], [0], [0, 0, 1, 0], [], []>} : vector<16x256xf32>, vector<256x256xf32>, vector<16x256xf32> -> vector<16x256xf32>
    %12 = arith.addf %9, %11 : vector<16x256xf32>
    %c0_9 = arith.constant 0 : index
    %c0_10 = arith.constant 0 : index
    %13 = vector.load %arg8[%c0_9, %c0_10] : memref<16x256xf32, #tpu.memory_space<vmem>>, vector<16x256xf32>
    tpu.vector_store %arg8[%c0_9, %c0_10], %12 {strides = array<i32>} : memref<16x256xf32, #tpu.memory_space<vmem>>, vector<16x256xf32>,
    %c0_i32_11 = arith.constant 0 : i32
    %14 = arith.cmpi eq, %arg1, %c0_i32_11 : i32
    %15 = arith.extui %14 : i1 to i32
    %c0_i32_12 = arith.constant 0 : i32
    %16 = arith.cmpi ne, %15, %c0_i32_12 : i32
    scf.if %16 {
      %c0_15 = arith.constant 0 : index
      %c0_16 = arith.constant 0 : index
      %20 = vector.load %arg9[%c0_15, %c0_16] : memref<16x128xf32, #tpu.memory_space<vmem>>, vector<16x128xf32>
      %c0_17 = arith.constant 0 : index
      %c0_18 = arith.constant 0 : index
      %21 = vector.load %arg6[%c0_17, %c0_18] : memref<128x256xf32, #tpu.memory_space<vmem>>, vector<128x256xf32>
      %cst_19 = arith.constant dense<0.000000e+00> : vector<16x128xf32>
      %22 = tpu.matmul %8, %21, %cst_19 {dimension_numbers = #tpu.dot_dimension_numbers<[1], [1], [0], [0], [0, 0, 1, 0], [], []>} : vector<16x256xf32>, vector<128x256xf32>, vector<16x128xf32> -> vector<16x128xf32>
      %23 = arith.addf %20, %22 : vector<16x128xf32>
      %c0_20 = arith.constant 0 : index
      %c0_21 = arith.constant 0 : index
      %24 = vector.load %arg9[%c0_20, %c0_21] : memref<16x128xf32, #tpu.memory_space<vmem>>, vector<16x128xf32>
      tpu.vector_store %arg9[%c0_20, %c0_21], %23 {strides = array<i32>} : memref<16x128xf32, #tpu.memory_space<vmem>>, vector<16x128xf32>,
    } else {
    }
    %c0_i32_13 = arith.constant 0 : i32
    %17 = arith.cmpi eq, %arg2, %c0_i32_13 : i32
    %18 = arith.extui %17 : i1 to i32
    %c0_i32_14 = arith.constant 0 : i32
    %19 = arith.cmpi ne, %18, %c0_i32_14 : i32
    scf.if %19 {
      %c0_15 = arith.constant 0 : index
      %c0_16 = arith.constant 0 : index
      %20 = vector.load %arg9[%c0_15, %c0_16] : memref<16x128xf32, #tpu.memory_space<vmem>>, vector<16x128xf32>
      %c0_17 = arith.constant 0 : index
      %c0_18 = arith.constant 0 : index
      %21 = vector.load %arg7[%c0_17, %c0_18] : memref<256x128xf32, #tpu.memory_space<vmem>>, vector<256x128xf32>
      %cst_19 = arith.constant dense<0.000000e+00> : vector<16x256xf32>
      %22 = tpu.matmul %20, %21, %cst_19 {dimension_numbers = #tpu.dot_dimension_numbers<[1], [1], [0], [0], [0, 0, 1, 0], [], []>} : vector<16x128xf32>, vector<256x128xf32>, vector<16x256xf32> -> vector<16x256xf32>
      %c0_20 = arith.constant 0 : index
      %c0_21 = arith.constant 0 : index
      %23 = vector.load %arg8[%c0_20, %c0_21] : memref<16x256xf32, #tpu.memory_space<vmem>>, vector<16x256xf32>
      %c0_22 = arith.constant 0 : index
      %c0_23 = arith.constant 0 : index
      %24 = vector.load %arg5[%c0_22, %c0_23] : memref<1x256xf32, #tpu.memory_space<vmem>>, vector<1x256xf32>
      %25 = vector.broadcast %24 : vector<1x256xf32> to vector<16x256xf32>
      %26 = arith.addf %23, %25 : vector<16x256xf32>
      %27 = arith.addf %26, %22 : vector<16x256xf32>
      %c0_24 = arith.constant 0 : index
      %c0_25 = arith.constant 0 : index
      %28 = vector.load %arg8[%c0_24, %c0_25] : memref<16x256xf32, #tpu.memory_space<vmem>>, vector<16x256xf32>
      tpu.vector_store %arg8[%c0_24, %c0_25], %27 {strides = array<i32>} : memref<16x256xf32, #tpu.memory_space<vmem>>, vector<16x256xf32>,
    } else {
    }
    return
  }
  func.func @transform_0(%arg0: i32, %arg1: i32, %arg2: i32) -> (i32, i32) {
    %c0_i32 = arith.constant 0 : i32
    return %arg0, %arg2 : i32, i32
  }
  func.func @transform_1(%arg0: i32, %arg1: i32, %arg2: i32) -> (i32, i32) {
    %c0_i32 = arith.constant 0 : i32
    return %arg1, %arg2 : i32, i32
  }
  func.func @transform_2(%arg0: i32, %arg1: i32, %arg2: i32) -> (i32, i32) {
    %c0_i32 = arith.constant 0 : i32
    %c0_i32_0 = arith.constant 0 : i32
    return %c0_i32, %arg1 : i32, i32
  }
  func.func @transform_3(%arg0: i32, %arg1: i32, %arg2: i32) -> (i32, i32) {
    %c0_i32 = arith.constant 0 : i32
    %c0_i32_0 = arith.constant 0 : i32
    return %c0_i32, %arg2 : i32, i32
  }
  func.func @transform_4(%arg0: i32, %arg1: i32, %arg2: i32) -> (i32, i32) {
    %c0_i32 = arith.constant 0 : i32
    %c0_i32_0 = arith.constant 0 : i32
    return %arg1, %c0_i32 : i32, i32
  }
  func.func @transform_5(%arg0: i32, %arg1: i32, %arg2: i32) -> (i32, i32) {
    %c0_i32 = arith.constant 0 : i32
    return %arg0, %arg1 : i32, i32
  }
}

</mosaic_0001>

<llo_original>
// kernel: tpu_custom_call.1
$region0: #{tpu_custom_call.1}
  #allocation0 [shape = 'u32[]', space=smem, size = 0x4, offset = 0x4, fixed_abs, tag = 'smem constant byte address 0x4 - core index']
  #allocation1 [shape = 'u32[144,128]{1,0:T(1,128)}', space=vmem, size = 0x12000, scoped, tag = 'internal scratch']
  #allocation2 [shape = 'f32[16,128]{1,0:T(8,128)}', space=vmem, size = 0x2000, scoped, tag = 'scratch operand']
  %s0 = inlined_call_operand.hbm [shape: f32[32,256], index: 0, kind: input, shape index: {}]
  %s1 = inlined_call_operand.hbm [shape: f32[256,256], index: 1, kind: input, shape index: {}]
  %s2 = inlined_call_operand.vmem [shape: f32[1,256], index: 2, kind: input, shape index: {}]
  %s3 = inlined_call_operand.hbm [shape: f32[128,256], index: 3, kind: input, shape index: {}]
  %s4 = inlined_call_operand.hbm [shape: f32[256,128], index: 4, kind: input, shape index: {}]
  %s5 = inlined_call_operand.hbm [shape: f32[32,256], index: 5, kind: output, shape index: {}]
  %s6 = sld [smem:[#allocation0]]
  $region85: #{tpu_custom_call.1} parent=0
    _
  %s8 = ssub.s32 1, %s6
  %s9 = scalar_select 0, %s8, %s6
  $region1: #{tpu_custom_call.1} parent=0
    #allocation3 [shape = 'u8[32768]{0}', space=vmem, size = 0x8000, scoped, tag = 'input window, operand 0']
    #allocation4 [shape = 's32[2]{0}', space=sflag, size = 0x8, scoped, tag = 'scoped memory for tpu_custom_call.1']
    #allocation5 [shape = 's32[2]{0}', space=sflag, size = 0x8, scoped, tag = 'scoped memory for tpu_custom_call.1']
    #allocation6 [shape = 'u8[262144]{0}', space=vmem, size = 0x40000, scoped, tag = 'input window, operand 1, single buffered']
    #allocation7 [shape = 's32[1]{0}', space=sflag, size = 0x4, scoped, tag = 'scoped memory for tpu_custom_call.1']
    #allocation8 [shape = 'u8[131072]{0}', space=vmem, size = 0x20000, scoped, tag = 'input window, operand 3, single buffered']
    #allocation9 [shape = 'u8[131072]{0}', space=vmem, size = 0x20000, scoped, tag = 'input window, operand 4, single buffered']
    #allocation10 [shape = 's32[1]{0}', space=sflag, size = 0x4, scoped, tag = 'scoped memory for tpu_custom_call.1']
    #allocation11 [shape = 'u8[32768]{0}', space=vmem, size = 0x8000, scoped, tag = 'output window, operand 0']
    %10 = vsyncpa [#allocation4], 0
    %s11 = scalar_lea.sflag [#allocation4], 1
    %12 = vsyncpa %s11, 0
    %13 = vsyncpa [#allocation7], 0
    %14 = vsyncpa [#allocation10], 0
    %15 = vsyncpa [#allocation5], 0
    %s16 = scalar_lea.sflag [#allocation5], 1
    %17 = vsyncpa %s16, 0
    loop: start=0, step=1, limit=4
    $region2: #{tpu_custom_call.1} parent=1 // loop_pre_header
      _
    $region3: #{tpu_custom_call.1} parent=1 // loop_header
      %s19 = sphi 0, %s23
      %p20 = scmp.ge.s32.totalorder %s19, 4
      %s26 = sphi 0, %s45
      %s27 = sphi 0, %s41
      %s28 = sphi 0, %s37
      %s29 = sphi 0, %s26
      %s30 = sphi 0, %s27
      %s31 = sphi 0, %s28
      %s32 = sphi 0, %s29
      %s33 = sphi 0, %s30
      %s34 = sphi 0, %s31
      %s50 = sphi 0, %s52
      %s53 = sphi 0, %s50
      %s54 = sphi 0, %s53
      %s70 = sphi 0, %s54
      %s78 = sphi 0, %s80
      %s81 = sphi 0, %s78
      %s82 = sphi 0, %s81
      %s98 = sphi 0, %s82
      %s104 = sphi 0, %s106
      %s107 = sphi 0, %s104
      %s108 = sphi 0, %s107
      %s124 = sphi 0, %s108
      %s130 = sphi 0, %s132
      %s133 = sphi 0, %s130
      %s134 = sphi 0, %s133
      %s150 = sphi 0, %s134
      %s156 = sphi 0, %s158
      %s159 = sphi 0, %s156
      %s160 = sphi 0, %s159
      %s176 = sphi 0, %s160
      %s184 = sphi 0, %s186
      %s187 = sphi 0, %s184
      %s188 = sphi 0, %s187
      %s204 = sphi 0, %s188
    $region4: #{tpu_custom_call.1} parent=1 // loop_header_branch
      %22 = sbr.rel (%p20) target = $region8
    $region5: #{tpu_custom_call.1} parent=1 // loop_body
      %s24 = ssub.s32 %s19, 1
      %s25 = ssub.s32 %s19, 2
      %s35 = sadd.s32 1, %s28
      %p36 = scmp.ge.s32.totalorder %s35, 1
      %s37 = scalar_select %p36, 0, %s35
      %s38 = sadd.s32 1, %s27
      %s39 = scalar_select %p36, %s38, %s27
      %p40 = scmp.ge.s32.totalorder %s39, 1
      %s41 = scalar_select %p40, 0, %s39
      %s42 = sadd.s32 1, %s26
      %s43 = scalar_select %p40, %s42, %s26
      %p44 = scmp.ge.s32.totalorder %s43, 2
      %s45 = scalar_select %p44, 0, %s43
      %s46 = ssub.s32 %s26, %s45
      %s47 = ssub.s32 %s28, %s37
      %s48 = sor.u32 %s46, %s47
      %p49 = scmp.eq.s32.totalorder %s48, 0
      %s51 = sadd.s32 %s50, 1
      %s52 = scalar_select %p49, %s50, %s51
      %p55 = pneg %p49
      %p56 = scmp.eq.s32.totalorder %s19, 1
      %p57 = por %p55, %p56
      %p58 = scmp.ne.s32.totalorder %s50, %s53
      %p59 = scmp.eq.s32.totalorder %s19, 0
      %p60 = por %p58, %p59
      %p61 = scmp.ne.s32.totalorder %s50, %s53
      %p62 = scmp.eq.s32.totalorder %s24, 1
      %p63 = por %p61, %p62
      %p64 = scmp.ne.s32.totalorder %s53, %s54
      %p65 = scmp.eq.s32.totalorder %s24, 0
      %p66 = por %p64, %p65
      %p67 = scmp.ne.s32.totalorder %s53, %s54
      %p68 = scmp.eq.s32.totalorder %s25, 1
      %p69 = por %p67, %p68
      %p71 = scmp.ne.s32.totalorder %s54, %s70
      %p72 = scmp.eq.s32.totalorder %s25, 0
      %p73 = por %p71, %p72
      %s74 = ssub.s32 %s27, %s41
      %s75 = ssub.s32 %s28, %s37
      %s76 = sor.u32 %s74, %s75
      %p77 = scmp.eq.s32.totalorder %s76, 0
      %s79 = sadd.s32 %s78, 1
      %s80 = scalar_select %p77, %s78, %s79
      %p83 = pneg %p77
      %p84 = scmp.eq.s32.totalorder %s19, 1
      %p85 = por %p83, %p84
      %p86 = scmp.ne.s32.totalorder %s78, %s81
      %p87 = scmp.eq.s32.totalorder %s19, 0
      %p88 = por %p86, %p87
      %p89 = scmp.ne.s32.totalorder %s78, %s81
      %p90 = scmp.eq.s32.totalorder %s24, 1
      %p91 = por %p89, %p90
      %p92 = scmp.ne.s32.totalorder %s81, %s82
      %p93 = scmp.eq.s32.totalorder %s24, 0
      %p94 = por %p92, %p93
      %p95 = scmp.ne.s32.totalorder %s81, %s82
      %p96 = scmp.eq.s32.totalorder %s25, 1
      %p97 = por %p95, %p96
      %p99 = scmp.ne.s32.totalorder %s82, %s98
      %p100 = scmp.eq.s32.totalorder %s25, 0
      %p101 = por %p99, %p100
      %s102 = ssub.s32 %s27, %s41
      %p103 = scmp.eq.s32.totalorder %s102, 0
      %s105 = sadd.s32 %s104, 1
      %s106 = scalar_select %p103, %s104, %s105
      %p109 = pneg %p103
      %p110 = scmp.eq.s32.totalorder %s19, 1
      %p111 = por %p109, %p110
      %p112 = scmp.ne.s32.totalorder %s104, %s107
      %p113 = scmp.eq.s32.totalorder %s19, 0
      %p114 = por %p112, %p113
      %p115 = scmp.ne.s32.totalorder %s104, %s107
      %p116 = scmp.eq.s32.totalorder %s24, 1
      %p117 = por %p115, %p116
      %p118 = scmp.ne.s32.totalorder %s107, %s108
      %p119 = scmp.eq.s32.totalorder %s24, 0
      %p120 = por %p118, %p119
      %p121 = scmp.ne.s32.totalorder %s107, %s108
      %p122 = scmp.eq.s32.totalorder %s25, 1
      %p123 = por %p121, %p122
      %p125 = scmp.ne.s32.totalorder %s108, %s124
      %p126 = scmp.eq.s32.totalorder %s25, 0
      %p127 = por %p125, %p126
      %s128 = ssub.s32 %s28, %s37
      %p129 = scmp.eq.s32.totalorder %s128, 0
      %s131 = sadd.s32 %s130, 1
      %s132 = scalar_select %p129, %s130, %s131
      %p135 = pneg %p129
      %p136 = scmp.eq.s32.totalorder %s19, 1
      %p137 = por %p135, %p136
      %p138 = scmp.ne.s32.totalorder %s130, %s133
      %p139 = scmp.eq.s32.totalorder %s19, 0
      %p140 = por %p138, %p139
      %p141 = scmp.ne.s32.totalorder %s130, %s133
      %p142 = scmp.eq.s32.totalorder %s24, 1
      %p143 = por %p141, %p142
      %p144 = scmp.ne.s32.totalorder %s133, %s134
      %p145 = scmp.eq.s32.totalorder %s24, 0
      %p146 = por %p144, %p145
      %p147 = scmp.ne.s32.totalorder %s133, %s134
      %p148 = scmp.eq.s32.totalorder %s25, 1
      %p149 = por %p147, %p148
      %p151 = scmp.ne.s32.totalorder %s134, %s150
      %p152 = scmp.eq.s32.totalorder %s25, 0
      %p153 = por %p151, %p152
      %s154 = ssub.s32 %s27, %s41
      %p155 = scmp.eq.s32.totalorder %s154, 0
      %s157 = sadd.s32 %s156, 1
      %s158 = scalar_select %p155, %s156, %s157
      %p161 = pneg %p155
      %p162 = scmp.eq.s32.totalorder %s19, 1
      %p163 = por %p161, %p162
      %p164 = scmp.ne.s32.totalorder %s156, %s159
      %p165 = scmp.eq.s32.totalorder %s19, 0
      %p166 = por %p164, %p165
      %p167 = scmp.ne.s32.totalorder %s156, %s159
      %p168 = scmp.eq.s32.totalorder %s24, 1
      %p169 = por %p167, %p168
      %p170 = scmp.ne.s32.totalorder %s159, %s160
      %p171 = scmp.eq.s32.totalorder %s24, 0
      %p172 = por %p170, %p171
      %p173 = scmp.ne.s32.totalorder %s159, %s160
      %p174 = scmp.eq.s32.totalorder %s25, 1
      %p175 = por %p173, %p174
      %p177 = scmp.ne.s32.totalorder %s160, %s176
      %p178 = scmp.eq.s32.totalorder %s25, 0
      %p179 = por %p177, %p178
      %s180 = ssub.s32 %s26, %s45
      %s181 = ssub.s32 %s27, %s41
      %s182 = sor.u32 %s180, %s181
      %p183 = scmp.eq.s32.totalorder %s182, 0
      %s185 = sadd.s32 %s184, 1
      %s186 = scalar_select %p183, %s184, %s185
      %p189 = pneg %p183
      %p190 = scmp.eq.s32.totalorder %s19, 1
      %p191 = por %p189, %p190
      %p192 = scmp.ne.s32.totalorder %s184, %s187
      %p193 = scmp.eq.s32.totalorder %s19, 0
      %p194 = por %p192, %p193
      %p195 = scmp.ne.s32.totalorder %s184, %s187
      %p196 = scmp.eq.s32.totalorder %s24, 1
      %p197 = por %p195, %p196
      %p198 = scmp.ne.s32.totalorder %s187, %s188
      %p199 = scmp.eq.s32.totalorder %s24, 0
      %p200 = por %p198, %p199
      %p201 = scmp.ne.s32.totalorder %s187, %s188
      %p202 = scmp.eq.s32.totalorder %s25, 1
      %p203 = por %p201, %p202
      %p205 = scmp.ne.s32.totalorder %s188, %s204
      %p206 = scmp.eq.s32.totalorder %s25, 0
      %p207 = por %p205, %p206
      %p208 = scmp.le.s32.totalorder 1, %s19
      %p209 = scmp.lt.s32.totalorder %s19, 3
      %p210 = pnand %p208, %p209
      %p211 = pneg %p210
      // Predicated region
      $region9: #{tpu_custom_call.1} parent=5 // pred_check
        _
      $region10: #{tpu_custom_call.1} parent=5 // pred_check_branch
        %213 = sbr.rel (%p210) target = $region12
      $region11: #{tpu_custom_call.1} parent=5 // pred_region
        %s214 = ssub.s32 %s19, 1
        // Predicated region
        $region13: #{tpu_custom_call.1} parent=11 // pred_check
          %p215 = pneg %p94
        $region14: #{tpu_custom_call.1} parent=11 // pred_check_branch
          %217 = sbr.rel (%p215) target = $region16
        $region15: #{tpu_custom_call.1} parent=11 // pred_region
          %s218 = smul.u32 32, %s30
          %s219 = smul.u32 2, %s31
          %s221 = ssub.s32 8192, 8192
          %222 = vsyncadd [#allocation7], %s221
          %s223 = smul.addr %s218, 2
          %s224 = sadd.s32 %s219, %s223
          %s225 = smul.addr %s224, 128
          %s226 = scalar_lea.hbm %s1, %s225
          %s227 = sshll.u32 [#allocation6], 4
          %s228 = int_to_ptr.vmem [resolvable:$true] %s227
          %233 = dma.hbm_to_vmem [thread:$0]  %s226, 8192, %s228, [#allocation7], 256, 256, 16
        $region16: #{tpu_custom_call.1} parent=11 // pred_fallthru
          _
        // Predicated region
        $region17: #{tpu_custom_call.1} parent=11 // pred_check
          %p234 = pneg %p120
        $region18: #{tpu_custom_call.1} parent=11 // pred_check_branch
          %236 = sbr.rel (%p234) target = $region20
        $region19: #{tpu_custom_call.1} parent=11 // pred_region
          %s237 = smul.u32 2, %s30
          %p238 = scmp.lt.s32.totalorder %s237, 1
          %s239 = scalar_select %p238, %s237, 1
          %s240 = scalar_lea.vmem %s2, %s239
          %s241 = smul.u32 2, %s30
        $region20: #{tpu_custom_call.1} parent=11 // pred_fallthru
          _
        // Predicated region
        $region21: #{tpu_custom_call.1} parent=11 // pred_check
          %p242 = pneg %p146
        $region22: #{tpu_custom_call.1} parent=11 // pred_check_branch
          %244 = sbr.rel (%p242) target = $region24
        $region23: #{tpu_custom_call.1} parent=11 // pred_region
          %s245 = smul.u32 2, %s31
          %s247 = ssub.s32 4096, 4096
          %248 = vsyncadd [#allocation7], %s247
          %s249 = smul.addr %s245, 128
          %s250 = scalar_lea.hbm %s3, %s249
          %s251 = sshll.u32 [#allocation8], 4
          %s252 = int_to_ptr.vmem [resolvable:$true] %s251
          %257 = dma.hbm_to_vmem [thread:$0]  %s250, 4096, %s252, [#allocation7], 256, 256, 16
        $region24: #{tpu_custom_call.1} parent=11 // pred_fallthru
          _
        // Predicated region
        $region25: #{tpu_custom_call.1} parent=11 // pred_check
          %p258 = pneg %p172
        $region26: #{tpu_custom_call.1} parent=11 // pred_check_branch
          %260 = sbr.rel (%p258) target = $region28
        $region27: #{tpu_custom_call.1} parent=11 // pred_region
          %s261 = smul.u32 32, %s30
          %s263 = ssub.s32 4096, 4096
          %264 = vsyncadd [#allocation10], %s263
          %s265 = smul.addr %s261, 128
          %s266 = scalar_lea.hbm %s4, %s265
          %s267 = sshll.u32 [#allocation9], 4
          %s268 = int_to_ptr.vmem [resolvable:$true] %s267
          %273 = dma.hbm_to_vmem [thread:$0]  %s266, 4096, %s268, [#allocation10], 128, 128, 8
        $region28: #{tpu_custom_call.1} parent=11 // pred_fallthru
          _
      $region12: #{tpu_custom_call.1} parent=5 // pred_fallthru
        _
      %p274 = scmp.lt.s32.totalorder %s19, 2
      // Predicated region
      $region29: #{tpu_custom_call.1} parent=5 // pred_check
        %p275 = pneg %p274
      $region30: #{tpu_custom_call.1} parent=5 // pred_check_branch
        %277 = sbr.rel (%p275) target = $region32
      $region31: #{tpu_custom_call.1} parent=5 // pred_region
        // Predicated region
        $region33: #{tpu_custom_call.1} parent=31 // pred_check
          %p278 = pneg %p60
        $region34: #{tpu_custom_call.1} parent=31 // pred_check_branch
          %280 = sbr.rel (%p278) target = $region36
        $region35: #{tpu_custom_call.1} parent=31 // pred_region
          %s281 = sand.u32 %s50, 1
          %s282 = scalar_lea.sflag [#allocation4], %s281
          %s283 = sand.u32 %s50, 1
          %s284 = smul.addr %s283, 32
          %s285 = scalar_lea.vmem [#allocation3], %s284
          %s286 = smul.u32 2, %s26
          %s287 = smul.u32 2, %s28
          %s289 = ssub.s32 512, 512
          %290 = vsyncadd %s282, %s289
          %s291 = smul.addr %s286, 2
          %s292 = sadd.s32 %s287, %s291
          %s293 = smul.addr %s292, 128
          %s294 = scalar_lea.hbm %s0, %s293
          %s295 = sshll.u32 %s285, 4
          %s296 = int_to_ptr.vmem [resolvable:$true] %s295
          %301 = dma.hbm_to_vmem [thread:$0]  %s294, 512, %s296, %s282, 256, 256, 16
        $region36: #{tpu_custom_call.1} parent=31 // pred_fallthru
          _
      $region32: #{tpu_custom_call.1} parent=5 // pred_fallthru
        _
      %p302 = scmp.le.s32.totalorder 1, %s19
      %p303 = scmp.lt.s32.totalorder %s19, 3
      %p304 = pnand %p302, %p303
      %p305 = pneg %p304
      // Predicated region
      $region37: #{tpu_custom_call.1} parent=5 // pred_check
        _
      $region38: #{tpu_custom_call.1} parent=5 // pred_check_branch
        %307 = sbr.rel (%p304) target = $region40
      $region39: #{tpu_custom_call.1} parent=5 // pred_region
        %s308 = ssub.s32 %s19, 1
        %s309 = sand.u32 %s53, 1
        %s310 = scalar_lea.sflag [#allocation4], %s309
        %s311 = sand.u32 %s53, 1
        %s312 = smul.addr %s311, 32
        %s313 = scalar_lea.vmem [#allocation3], %s312
        // Predicated region
        $region41: #{tpu_custom_call.1} parent=39 // pred_check
          %p314 = pneg %p66
        $region42: #{tpu_custom_call.1} parent=39 // pred_check_branch
          %316 = sbr.rel (%p314) target = $region44
        $region43: #{tpu_custom_call.1} parent=39 // pred_region
          %317 = dma.done %s310, 512
        $region44: #{tpu_custom_call.1} parent=39 // pred_fallthru
          _
        // Predicated region
        $region45: #{tpu_custom_call.1} parent=39 // pred_check
          %p318 = pneg %p94
        $region46: #{tpu_custom_call.1} parent=39 // pred_check_branch
          %320 = sbr.rel (%p318) target = $region48
        $region47: #{tpu_custom_call.1} parent=39 // pred_region
          %321 = dma.done [#allocation7], 8192
        $region48: #{tpu_custom_call.1} parent=39 // pred_fallthru
          _
        // Predicated region
        $region49: #{tpu_custom_call.1} parent=39 // pred_check
          %p322 = pneg %p146
        $region50: #{tpu_custom_call.1} parent=39 // pred_check_branch
          %324 = sbr.rel (%p322) target = $region52
        $region51: #{tpu_custom_call.1} parent=39 // pred_region
          %325 = dma.done [#allocation7], 4096
        $region52: #{tpu_custom_call.1} parent=39 // pred_fallthru
          _
        // Predicated region
        $region53: #{tpu_custom_call.1} parent=39 // pred_check
          %p326 = pneg %p172
        $region54: #{tpu_custom_call.1} parent=39 // pred_check_branch
          %328 = sbr.rel (%p326) target = $region56
        $region55: #{tpu_custom_call.1} parent=39 // pred_region
          %329 = dma.done [#allocation10], 4096
        $region56: #{tpu_custom_call.1} parent=39 // pred_fallthru
          _
        %s330 = sand.u32 %s53, 1
        %s331 = scalar_lea.sflag [#allocation4], %s330
        %s332 = sand.u32 %s53, 1
        %s333 = smul.addr %s332, 32
        %s334 = scalar_lea.vmem [#allocation3], %s333
        %p335 = pneg %p66
        %p336 = pneg %p63
        %p337 = pneg %p94
        %p338 = pneg %p91
        %s339 = smul.u32 2, %s30
        %p340 = scmp.lt.s32.totalorder %s339, 1
        %s341 = scalar_select %p340, %s339, 1
        %s342 = scalar_lea.vmem %s2, %s341
        %p343 = pneg %p120
        %p344 = pneg %p117
        %p345 = pneg %p146
        %p346 = pneg %p143
        %p347 = pneg %p172
        %p348 = pneg %p169
        %p349 = pneg %p200
        %p350 = pneg %p197
        %s351 = sand.u32 %s187, 1
        %s352 = scalar_lea.sflag [#allocation5], %s351
        %s353 = sand.u32 %s187, 1
        %s354 = smul.addr %s353, 32
        %s355 = scalar_lea.vmem [#allocation11], %s354
        %s356 = smul.u32 2, %s29
        %s357 = smul.u32 2, %s31
        %s358 = smul.u32 32, %s30
        %s359 = smul.u32 2, %s31
        %s360 = smul.u32 2, %s30
        %p361 = scmp.lt.s32.totalorder %s360, 1
        %s362 = scalar_select %p361, %s360, 1
        %s363 = scalar_lea.vmem %s2, %s362
        %s364 = smul.u32 2, %s30
        %s365 = smul.u32 2, %s31
        %s366 = smul.u32 32, %s30
        %s367 = smul.u32 2, %s29
        %s368 = smul.u32 2, %s30
        %p369 = scmp.eq.s32.totalorder %s31, 0
        // Predicated region
        $region57: #{tpu_custom_call.1} parent=39 // pred_check
          %p370 = pneg %p369
        $region58: #{tpu_custom_call.1} parent=39 // pred_check_branch
          %372 = sbr.rel (%p370) target = $region60
        $region59: #{tpu_custom_call.1} parent=39 // pred_region
          %373 = vst [vmem:[%s355] sm:$0xff] 0.0
          %374 = vst [vmem:[%s355 + $0x8] sm:$0xff] 0.0
          %375 = vst [vmem:[%s355 + $0x10] sm:$0xff] 0.0
          %376 = vst [vmem:[%s355 + $0x18] sm:$0xff] 0.0
        $region60: #{tpu_custom_call.1} parent=39 // pred_fallthru
          _
        %p377 = scmp.eq.s32.totalorder %s30, 0
        %p378 = pnand %p369, %p377
        %p379 = pneg %p378
        // Predicated region
        $region61: #{tpu_custom_call.1} parent=39 // pred_check
          _
        $region62: #{tpu_custom_call.1} parent=39 // pred_check_branch
          %381 = sbr.rel (%p378) target = $region64
        $region63: #{tpu_custom_call.1} parent=39 // pred_region
          %382 = vst [vmem:[#allocation2] sm:$0xff] 0.0
          %383 = vst [vmem:[#allocation2 + $0x8] sm:$0xff] 0.0
        $region64: #{tpu_custom_call.1} parent=39 // pred_fallthru
          _
        %v384 = vld [vmem:[%s313] sm:$0xff]
        %v385 = vld [vmem:[%s313 + $0x8] sm:$0xff]
        %v386 = vld [vmem:[%s313 + $0x10] sm:$0xff]
        %v387 = vld [vmem:[%s313 + $0x18] sm:$0xff]
        %v388 = vld [vmem:[%s355] sm:$0xff]
        %v389 = vld [vmem:[%s355 + $0x8] sm:$0xff]
        %v390 = vld [vmem:[%s355 + $0x10] sm:$0xff]
        %v391 = vld [vmem:[%s355 + $0x18] sm:$0xff]
        %v392 = vld [vmem:[#allocation6] sm:$0xff]
        %v393 = vld [vmem:[#allocation6 + $0x8] sm:$0xff]
        %v394 = vld [vmem:[#allocation6 + $0x10] sm:$0xff]
        %v395 = vld [vmem:[#allocation6 + $0x18] sm:$0xff]
        %v396 = vld [vmem:[#allocation6 + $0x20] sm:$0xff]
        %v397 = vld [vmem:[#allocation6 + $0x28] sm:$0xff]
        %v398 = vld [vmem:[#allocation6 + $0x30] sm:$0xff]
        %v399 = vld [vmem:[#allocation6 + $0x38] sm:$0xff]
        %v400 = vld [vmem:[#allocation6 + $0x40] sm:$0xff]
        %v401 = vld [vmem:[#allocation6 + $0x48] sm:$0xff]
        %v402 = vld [vmem:[#allocation6 + $0x50] sm:$0xff]
        %v403 = vld [vmem:[#allocation6 + $0x58] sm:$0xff]
        %v404 = vld [vmem:[#allocation6 + $0x60] sm:$0xff]
        %v405 = vld [vmem:[#allocation6 + $0x68] sm:$0xff]
        %v406 = vld [vmem:[#allocation6 + $0x70] sm:$0xff]
        %v407 = vld [vmem:[#allocation6 + $0x78] sm:$0xff]
        %v408 = vld [vmem:[#allocation6 + $0x80] sm:$0xff]
        %v409 = vld [vmem:[#allocation6 + $0x88] sm:$0xff]
        %v410 = vld [vmem:[#allocation6 + $0x90] sm:$0xff]
        %v411 = vld [vmem:[#allocation6 + $0x98] sm:$0xff]
        %v412 = vld [vmem:[#allocation6 + $0xa0] sm:$0xff]
        %v413 = vld [vmem:[#allocation6 + $0xa8] sm:$0xff]
        %v414 = vld [vmem:[#allocation6 + $0xb0] sm:$0xff]
        %v415 = vld [vmem:[#allocation6 + $0xb8] sm:$0xff]
        %v416 = vld [vmem:[#allocation6 + $0xc0] sm:$0xff]
        %v417 = vld [vmem:[#allocation6 + $0xc8] sm:$0xff]
        %v418 = vld [vmem:[#allocation6 + $0xd0] sm:$0xff]
        %v419 = vld [vmem:[#allocation6 + $0xd8] sm:$0xff]
        %v420 = vld [vmem:[#allocation6 + $0xe0] sm:$0xff]
        %v421 = vld [vmem:[#allocation6 + $0xe8] sm:$0xff]
        %v422 = vld [vmem:[#allocation6 + $0xf0] sm:$0xff]
        %v423 = vld [vmem:[#allocation6 + $0xf8] sm:$0xff]
        %v424 = vld [vmem:[#allocation6 + $0x100] sm:$0xff]
        %v425 = vld [vmem:[#allocation6 + $0x108] sm:$0xff]
        %v426 = vld [vmem:[#allocation6 + $0x110] sm:$0xff]
        %v427 = vld [vmem:[#allocation6 + $0x118] sm:$0xff]
        %v428 = vld [vmem:[#allocation6 + $0x120] sm:$0xff]
        %v429 = vld [vmem:[#allocation6 + $0x128] sm:$0xff]
        %v430 = vld [vmem:[#allocation6 + $0x130] sm:$0xff]
        %v431 = vld [vmem:[#allocation6 + $0x138] sm:$0xff]
        %v432 = vld [vmem:[#allocation6 + $0x140] sm:$0xff]
        %v433 = vld [vmem:[#allocation6 + $0x148] sm:$0xff]
        %v434 = vld [vmem:[#allocation6 + $0x150] sm:$0xff]
        %v435 = vld [vmem:[#allocation6 + $0x158] sm:$0xff]
        %v436 = vld [vmem:[#allocation6 + $0x160] sm:$0xff]
        %v437 = vld [vmem:[#allocation6 + $0x168] sm:$0xff]
        %v438 = vld [vmem:[#allocation6 + $0x170] sm:$0xff]
        %v439 = vld [vmem:[#allocation6 + $0x178] sm:$0xff]
        %v440 = vld [vmem:[#allocation6 + $0x180] sm:$0xff]
        %v441 = vld [vmem:[#allocation6 + $0x188] sm:$0xff]
        %v442 = vld [vmem:[#allocation6 + $0x190] sm:$0xff]
        %v443 = vld [vmem:[#allocation6 + $0x198] sm:$0xff]
        %v444 = vld [vmem:[#allocation6 + $0x1a0] sm:$0xff]
        %v445 = vld [vmem:[#allocation6 + $0x1a8] sm:$0xff]
        %v446 = vld [vmem:[#allocation6 + $0x1b0] sm:$0xff]
        %v447 = vld [vmem:[#allocation6 + $0x1b8] sm:$0xff]
        %v448 = vld [vmem:[#allocation6 + $0x1c0] sm:$0xff]
        %v449 = vld [vmem:[#allocation6 + $0x1c8] sm:$0xff]
        %v450 = vld [vmem:[#allocation6 + $0x1d0] sm:$0xff]
        %v451 = vld [vmem:[#allocation6 + $0x1d8] sm:$0xff]
        %v452 = vld [vmem:[#allocation6 + $0x1e0] sm:$0xff]
        %v453 = vld [vmem:[#allocation6 + $0x1e8] sm:$0xff]
        %v454 = vld [vmem:[#allocation6 + $0x1f0] sm:$0xff]
        %v455 = vld [vmem:[#allocation6 + $0x1f8] sm:$0xff]
        %456 = vmatprep.subr.mxu0 %v423
        %457 = vmatpush1.xpose.msra.mxu0 %v422
        %458 = vmatprep.subr.mxu0 %v421
        %459 = vmatpush1.xpose.msra.mxu0 %v420
        %460 = vmatprep.subr.mxu0 %v419
        %461 = vmatpush1.xpose.msra.mxu0 %v418
        %462 = vmatprep.subr.mxu0 %v417
        %463 = vmatpush1.xpose.msra.mxu0 %v416
        %464 = vmatprep.subr.mxu0 %v415
        %465 = vmatpush1.xpose.msra.mxu0 %v414
        %466 = vmatprep.subr.mxu0 %v413
        %467 = vmatpush1.xpose.msra.mxu0 %v412
        %468 = vmatprep.subr.mxu0 %v411
        %469 = vmatpush1.xpose.msra.mxu0 %v410
        %470 = vmatprep.subr.mxu0 %v409
        %471 = vmatpush1.xpose.msra.mxu0 %v408
        %472 = vmatprep.subr.mxu0 %v407
        %473 = vmatpush1.xpose.msra.mxu0 %v406
        %474 = vmatprep.subr.mxu0 %v405
        %475 = vmatpush1.xpose.msra.mxu0 %v404
        %476 = vmatprep.subr.mxu0 %v403
        %477 = vmatpush1.xpose.msra.mxu0 %v402
        %478 = vmatprep.subr.mxu0 %v401
        %479 = vmatpush1.xpose.msra.mxu0 %v400
        %480 = vmatprep.subr.mxu0 %v399
        %481 = vmatpush1.xpose.msra.mxu0 %v398
        %482 = vmatprep.subr.mxu0 %v397
        %483 = vmatpush1.xpose.msra.mxu0 %v396
        %484 = vmatprep.subr.mxu0 %v395
        %485 = vmatpush1.xpose.msra.mxu0 %v394
        %486 = vmatprep.subr.mxu0 %v393
        %487 = vmatpush1.xpose.msra.mxu0 %v392
        %488 = vmatprep.subr.mxu0 %v455
        %489 = vmatpush2.xpose.msra.mxu0 %v454
        %490 = vmatprep.subr.mxu0 %v453
        %491 = vmatpush2.xpose.msra.mxu0 %v452
        %492 = vmatprep.subr.mxu0 %v451
        %493 = vmatpush2.xpose.msra.mxu0 %v450
        %494 = vmatprep.subr.mxu0 %v449
        %495 = vmatpush2.xpose.msra.mxu0 %v448
        %496 = vmatprep.subr.mxu0 %v447
        %497 = vmatpush2.xpose.msra.mxu0 %v446
        %498 = vmatprep.subr.mxu0 %v445
        %499 = vmatpush2.xpose.msra.mxu0 %v444
        %500 = vmatprep.subr.mxu0 %v443
        %501 = vmatpush2.xpose.msra.mxu0 %v442
        %502 = vmatprep.subr.mxu0 %v441
        %503 = vmatpush2.xpose.msra.mxu0 %v440
        %504 = vmatprep.subr.mxu0 %v439
        %505 = vmatpush2.xpose.msra.mxu0 %v438
        %506 = vmatprep.subr.mxu0 %v437
        %507 = vmatpush2.xpose.msra.mxu0 %v436
        %508 = vmatprep.subr.mxu0 %v435
        %509 = vmatpush2.xpose.msra.mxu0 %v434
        %510 = vmatprep.subr.mxu0 %v433
        %511 = vmatpush2.xpose.msra.mxu0 %v432
        %512 = vmatprep.subr.mxu0 %v431
        %513 = vmatpush2.xpose.msra.mxu0 %v430
        %514 = vmatprep.subr.mxu0 %v429
        %515 = vmatpush2.xpose.msra.mxu0 %v428
        %516 = vmatprep.subr.mxu0 %v427
        %517 = vmatpush2.xpose.msra.mxu0 %v426
        %518 = vmatprep.subr.mxu0 %v425
        %519 = vmatpush2.xpose.msra.mxu0 %v424
        %520 = vmatprep.mubr.f32.mxu0 %v385
        %521 = vmatmul.mubr.f32.gmra.mxu0 %v384
        %v522 = vpop.f32.mrf.mxu0
        %v523 = vadd.f32 0.0, %v522
        %v524 = vpop.f32.mrf.mxu0
        %v525 = vadd.f32 0.0, %v524
        %526 = vmatprep.mubr.f32.mxu0 %v387
        %527 = vmatmul.mubr.f32.gmra.mxu0 %v386
        %v528 = vpop.f32.mrf.mxu0
        %v529 = vadd.f32 0.0, %v528
        %v530 = vpop.f32.mrf.mxu0
        %v531 = vadd.f32 0.0, %v530
        %532 = vdwg.mxu0
        %v533 = vadd.f32 %v388, %v523
        %v534 = vadd.f32 %v389, %v525
        %v535 = vadd.f32 %v390, %v529
        %v536 = vadd.f32 %v391, %v531
        %537 = vst [vmem:[%s355] sm:$0xff] %v533
        %538 = vst [vmem:[%s355 + $0x8] sm:$0xff] %v534
        %539 = vst [vmem:[%s355 + $0x10] sm:$0xff] %v535
        %540 = vst [vmem:[%s355 + $0x18] sm:$0xff] %v536
        // Predicated region
        $region65: #{tpu_custom_call.1} parent=39 // pred_check
          %p541 = pneg %p377
        $region66: #{tpu_custom_call.1} parent=39 // pred_check_branch
          %543 = sbr.rel (%p541) target = $region68
        $region67: #{tpu_custom_call.1} parent=39 // pred_region
          %v544 = vld [vmem:[#allocation2] sm:$0xff]
          %v545 = vld [vmem:[#allocation2 + $0x8] sm:$0xff]
          %v546 = vld [vmem:[#allocation8] sm:$0xff]
          %v547 = vld [vmem:[#allocation8 + $0x8] sm:$0xff]
          %v548 = vld [vmem:[#allocation8 + $0x10] sm:$0xff]
          %v549 = vld [vmem:[#allocation8 + $0x18] sm:$0xff]
          %v550 = vld [vmem:[#allocation8 + $0x20] sm:$0xff]
          %v551 = vld [vmem:[#allocation8 + $0x28] sm:$0xff]
          %v552 = vld [vmem:[#allocation8 + $0x30] sm:$0xff]
          %v553 = vld [vmem:[#allocation8 + $0x38] sm:$0xff]
          %v554 = vld [vmem:[#allocation8 + $0x40] sm:$0xff]
          %v555 = vld [vmem:[#allocation8 + $0x48] sm:$0xff]
          %v556 = vld [vmem:[#allocation8 + $0x50] sm:$0xff]
          %v557 = vld [vmem:[#allocation8 + $0x58] sm:$0xff]
          %v558 = vld [vmem:[#allocation8 + $0x60] sm:$0xff]
          %v559 = vld [vmem:[#allocation8 + $0x68] sm:$0xff]
          %v560 = vld [vmem:[#allocation8 + $0x70] sm:$0xff]
          %v561 = vld [vmem:[#allocation8 + $0x78] sm:$0xff]
          %v562 = vld [vmem:[#allocation8 + $0x80] sm:$0xff]
          %v563 = vld [vmem:[#allocation8 + $0x88] sm:$0xff]
          %v564 = vld [vmem:[#allocation8 + $0x90] sm:$0xff]
          %v565 = vld [vmem:[#allocation8 + $0x98] sm:$0xff]
          %v566 = vld [vmem:[#allocation8 + $0xa0] sm:$0xff]
          %v567 = vld [vmem:[#allocation8 + $0xa8] sm:$0xff]
          %v568 = vld [vmem:[#allocation8 + $0xb0] sm:$0xff]
          %v569 = vld [vmem:[#allocation8 + $0xb8] sm:$0xff]
          %v570 = vld [vmem:[#allocation8 + $0xc0] sm:$0xff]
          %v571 = vld [vmem:[#allocation8 + $0xc8] sm:$0xff]
          %v572 = vld [vmem:[#allocation8 + $0xd0] sm:$0xff]
          %v573 = vld [vmem:[#allocation8 + $0xd8] sm:$0xff]
          %v574 = vld [vmem:[#allocation8 + $0xe0] sm:$0xff]
          %v575 = vld [vmem:[#allocation8 + $0xe8] sm:$0xff]
          %v576 = vld [vmem:[#allocation8 + $0xf0] sm:$0xff]
          %v577 = vld [vmem:[#allocation8 + $0xf8] sm:$0xff]
          %578 = vmatprep.subr.mxu0 %v577
          %579 = vmatpush1.xpose.msra.mxu0 %v576
          %580 = vmatprep.subr.mxu0 %v575
          %581 = vmatpush1.xpose.msra.mxu0 %v574
          %582 = vmatprep.subr.mxu0 %v573
          %583 = vmatpush1.xpose.msra.mxu0 %v572
          %584 = vmatprep.subr.mxu0 %v571
          %585 = vmatpush1.xpose.msra.mxu0 %v570
          %586 = vmatprep.subr.mxu0 %v569
          %587 = vmatpush1.xpose.msra.mxu0 %v568
          %588 = vmatprep.subr.mxu0 %v567
          %589 = vmatpush1.xpose.msra.mxu0 %v566
          %590 = vmatprep.subr.mxu0 %v565
          %591 = vmatpush1.xpose.msra.mxu0 %v564
          %592 = vmatprep.subr.mxu0 %v563
          %593 = vmatpush1.xpose.msra.mxu0 %v562
          %594 = vmatprep.subr.mxu0 %v561
          %595 = vmatpush1.xpose.msra.mxu0 %v560
          %596 = vmatprep.subr.mxu0 %v559
          %597 = vmatpush1.xpose.msra.mxu0 %v558
          %598 = vmatprep.subr.mxu0 %v557
          %599 = vmatpush1.xpose.msra.mxu0 %v556
          %600 = vmatprep.subr.mxu0 %v555
          %601 = vmatpush1.xpose.msra.mxu0 %v554
          %602 = vmatprep.subr.mxu0 %v553
          %603 = vmatpush1.xpose.msra.mxu0 %v552
          %604 = vmatprep.subr.mxu0 %v551
          %605 = vmatpush1.xpose.msra.mxu0 %v550
          %606 = vmatprep.subr.mxu0 %v549
          %607 = vmatpush1.xpose.msra.mxu0 %v548
          %608 = vmatprep.subr.mxu0 %v547
          %609 = vmatpush1.xpose.msra.mxu0 %v546
          %610 = vmatprep.subr.mxu0 0.0
          %611 = vmatpush2.xpose.msra.mxu0 0.0
          %612 = vmatprep.subr.mxu0 0.0
          %613 = vmatpush2.xpose.msra.mxu0 0.0
          %614 = vmatprep.subr.mxu0 0.0
          %615 = vmatpush2.xpose.msra.mxu0 0.0
          %616 = vmatprep.subr.mxu0 0.0
          %617 = vmatpush2.xpose.msra.mxu0 0.0
          %618 = vmatprep.subr.mxu0 0.0
          %619 = vmatpush2.xpose.msra.mxu0 0.0
          %620 = vmatprep.subr.mxu0 0.0
          %621 = vmatpush2.xpose.msra.mxu0 0.0
          %622 = vmatprep.subr.mxu0 0.0
          %623 = vmatpush2.xpose.msra.mxu0 0.0
          %624 = vmatprep.subr.mxu0 0.0
          %625 = vmatpush2.xpose.msra.mxu0 0.0
          %626 = vmatprep.subr.mxu0 0.0
          %627 = vmatpush2.xpose.msra.mxu0 0.0
          %628 = vmatprep.subr.mxu0 0.0
          %629 = vmatpush2.xpose.msra.mxu0 0.0
          %630 = vmatprep.subr.mxu0 0.0
          %631 = vmatpush2.xpose.msra.mxu0 0.0
          %632 = vmatprep.subr.mxu0 0.0
          %633 = vmatpush2.xpose.msra.mxu0 0.0
          %634 = vmatprep.subr.mxu0 0.0
          %635 = vmatpush2.xpose.msra.mxu0 0.0
          %636 = vmatprep.subr.mxu0 0.0
          %637 = vmatpush2.xpose.msra.mxu0 0.0
          %638 = vmatprep.subr.mxu0 0.0
          %639 = vmatpush2.xpose.msra.mxu0 0.0
          %640 = vmatprep.subr.mxu0 0.0
          %641 = vmatpush2.xpose.msra.mxu0 0.0
          %642 = vmatprep.mubr.f32.mxu0 %v385
          %643 = vmatmul.mubr.f32.gmra.mxu0 %v384
          %v644 = vpop.f32.mrf.mxu0
          %v645 = vadd.f32 0.0, %v644
          %v646 = vpop.f32.mrf.mxu0
          %647 = vmatprep.mubr.f32.mxu0 %v387
          %648 = vmatmul.mubr.f32.gmra.mxu0 %v386
          %v649 = vpop.f32.mrf.mxu0
          %v650 = vadd.f32 0.0, %v649
          %v651 = vpop.f32.mrf.mxu0
          %652 = vdwg.mxu0
          %v653 = vadd.f32 %v544, %v645
          %v654 = vadd.f32 %v545, %v650
          %655 = vst [vmem:[#allocation2] sm:$0xff] %v653
          %656 = vst [vmem:[#allocation2 + $0x8] sm:$0xff] %v654
        $region68: #{tpu_custom_call.1} parent=39 // pred_fallthru
          _
        // Predicated region
        $region69: #{tpu_custom_call.1} parent=39 // pred_check
          %p657 = pneg %p369
        $region70: #{tpu_custom_call.1} parent=39 // pred_check_branch
          %659 = sbr.rel (%p657) target = $region72
        $region71: #{tpu_custom_call.1} parent=39 // pred_region
          %v660 = vld [vmem:[#allocation2] sm:$0xff]
          %v661 = vld [vmem:[#allocation2 + $0x8] sm:$0xff]
          %v662 = vld [vmem:[#allocation9] sm:$0xff]
          %v663 = vld [vmem:[#allocation9 + $0x8] sm:$0xff]
          %v664 = vld [vmem:[#allocation9 + $0x10] sm:$0xff]
          %v665 = vld [vmem:[#allocation9 + $0x18] sm:$0xff]
          %v666 = vld [vmem:[#allocation9 + $0x20] sm:$0xff]
          %v667 = vld [vmem:[#allocation9 + $0x28] sm:$0xff]
          %v668 = vld [vmem:[#allocation9 + $0x30] sm:$0xff]
          %v669 = vld [vmem:[#allocation9 + $0x38] sm:$0xff]
          %v670 = vld [vmem:[#allocation9 + $0x40] sm:$0xff]
          %v671 = vld [vmem:[#allocation9 + $0x48] sm:$0xff]
          %v672 = vld [vmem:[#allocation9 + $0x50] sm:$0xff]
          %v673 = vld [vmem:[#allocation9 + $0x58] sm:$0xff]
          %v674 = vld [vmem:[#allocation9 + $0x60] sm:$0xff]
          %v675 = vld [vmem:[#allocation9 + $0x68] sm:$0xff]
          %v676 = vld [vmem:[#allocation9 + $0x70] sm:$0xff]
          %v677 = vld [vmem:[#allocation9 + $0x78] sm:$0xff]
          %v678 = vld [vmem:[#allocation9 + $0x80] sm:$0xff]
          %v679 = vld [vmem:[#allocation9 + $0x88] sm:$0xff]
          %v680 = vld [vmem:[#allocation9 + $0x90] sm:$0xff]
          %v681 = vld [vmem:[#allocation9 + $0x98] sm:$0xff]
          %v682 = vld [vmem:[#allocation9 + $0xa0] sm:$0xff]
          %v683 = vld [vmem:[#allocation9 + $0xa8] sm:$0xff]
          %v684 = vld [vmem:[#allocation9 + $0xb0] sm:$0xff]
          %v685 = vld [vmem:[#allocation9 + $0xb8] sm:$0xff]
          %v686 = vld [vmem:[#allocation9 + $0xc0] sm:$0xff]
          %v687 = vld [vmem:[#allocation9 + $0xc8] sm:$0xff]
          %v688 = vld [vmem:[#allocation9 + $0xd0] sm:$0xff]
          %v689 = vld [vmem:[#allocation9 + $0xd8] sm:$0xff]
          %v690 = vld [vmem:[#allocation9 + $0xe0] sm:$0xff]
          %v691 = vld [vmem:[#allocation9 + $0xe8] sm:$0xff]
          %v692 = vld [vmem:[#allocation9 + $0xf0] sm:$0xff]
          %v693 = vld [vmem:[#allocation9 + $0xf8] sm:$0xff]
          %694 = vmatprep.subr.mxu0 0.0
          %695 = vmatpush1.xpose.msra.mxu0 %v677
          %696 = vmatprep.subr.mxu0 0.0
          %697 = vmatpush1.xpose.msra.mxu0 %v676
          %698 = vmatprep.subr.mxu0 0.0
          %699 = vmatpush1.xpose.msra.mxu0 %v675
          %700 = vmatprep.subr.mxu0 0.0
          %701 = vmatpush1.xpose.msra.mxu0 %v674
          %702 = vmatprep.subr.mxu0 0.0
          %703 = vmatpush1.xpose.msra.mxu0 %v673
          %704 = vmatprep.subr.mxu0 0.0
          %705 = vmatpush1.xpose.msra.mxu0 %v672
          %706 = vmatprep.subr.mxu0 0.0
          %707 = vmatpush1.xpose.msra.mxu0 %v671
          %708 = vmatprep.subr.mxu0 0.0
          %709 = vmatpush1.xpose.msra.mxu0 %v670
          %710 = vmatprep.subr.mxu0 0.0
          %711 = vmatpush1.xpose.msra.mxu0 %v669
          %712 = vmatprep.subr.mxu0 0.0
          %713 = vmatpush1.xpose.msra.mxu0 %v668
          %714 = vmatprep.subr.mxu0 0.0
          %715 = vmatpush1.xpose.msra.mxu0 %v667
          %716 = vmatprep.subr.mxu0 0.0
          %717 = vmatpush1.xpose.msra.mxu0 %v666
          %718 = vmatprep.subr.mxu0 0.0
          %719 = vmatpush1.xpose.msra.mxu0 %v665
          %720 = vmatprep.subr.mxu0 0.0
          %721 = vmatpush1.xpose.msra.mxu0 %v664
          %722 = vmatprep.subr.mxu0 0.0
          %723 = vmatpush1.xpose.msra.mxu0 %v663
          %724 = vmatprep.subr.mxu0 0.0
          %725 = vmatpush1.xpose.msra.mxu0 %v662
          %726 = vmatprep.subr.mxu0 0.0
          %727 = vmatpush2.xpose.msra.mxu0 %v693
          %728 = vmatprep.subr.mxu0 0.0
          %729 = vmatpush2.xpose.msra.mxu0 %v692
          %730 = vmatprep.subr.mxu0 0.0
          %731 = vmatpush2.xpose.msra.mxu0 %v691
          %732 = vmatprep.subr.mxu0 0.0
          %733 = vmatpush2.xpose.msra.mxu0 %v690
          %734 = vmatprep.subr.mxu0 0.0
          %735 = vmatpush2.xpose.msra.mxu0 %v689
          %736 = vmatprep.subr.mxu0 0.0
          %737 = vmatpush2.xpose.msra.mxu0 %v688
          %738 = vmatprep.subr.mxu0 0.0
          %739 = vmatpush2.xpose.msra.mxu0 %v687
          %740 = vmatprep.subr.mxu0 0.0
          %741 = vmatpush2.xpose.msra.mxu0 %v686
          %742 = vmatprep.subr.mxu0 0.0
          %743 = vmatpush2.xpose.msra.mxu0 %v685
          %744 = vmatprep.subr.mxu0 0.0
          %745 = vmatpush2.xpose.msra.mxu0 %v684
          %746 = vmatprep.subr.mxu0 0.0
          %747 = vmatpush2.xpose.msra.mxu0 %v683
          %748 = vmatprep.subr.mxu0 0.0
          %749 = vmatpush2.xpose.msra.mxu0 %v682
          %750 = vmatprep.subr.mxu0 0.0
          %751 = vmatpush2.xpose.msra.mxu0 %v681
          %752 = vmatprep.subr.mxu0 0.0
          %753 = vmatpush2.xpose.msra.mxu0 %v680
          %754 = vmatprep.subr.mxu0 0.0
          %755 = vmatpush2.xpose.msra.mxu0 %v679
          %756 = vmatprep.subr.mxu0 0.0
          %757 = vmatpush2.xpose.msra.mxu0 %v678
          %758 = vmatprep.mubr.f32.mxu0 0.0
          %759 = vmatmul.mubr.f32.gmra.mxu0 %v660
          %v760 = vpop.f32.mrf.mxu0
          %v761 = vadd.f32 0.0, %v760
          %v762 = vpop.f32.mrf.mxu0
          %v763 = vadd.f32 0.0, %v762
          %764 = vmatprep.mubr.f32.mxu0 0.0
          %765 = vmatmul.mubr.f32.gmra.mxu0 %v661
          %v766 = vpop.f32.mrf.mxu0
          %v767 = vadd.f32 0.0, %v766
          %v768 = vpop.f32.mrf.mxu0
          %v769 = vadd.f32 0.0, %v768
          %770 = vdwg.mxu0
          %v771 = vld [vmem:[%s355] sm:$0xff]
          %v772 = vld [vmem:[%s355 + $0x8] sm:$0xff]
          %v773 = vld [vmem:[%s355 + $0x10] sm:$0xff]
          %v774 = vld [vmem:[%s355 + $0x18] sm:$0xff]
          %v775 = vld [vmem:[%s363] sm:$0x3]
          %v777 = vlaneseq
          %v778 = vshrl.u32 %v777, 7
          %v779 = vsub.s32 0, %v778
          %v780 = vrot.slane %v775, %v779
          %v781 = vlaneseq
          %v782 = vshrl.u32 %v781, 7
          %v783 = vsub.s32 1, %v782
          %v784 = vrot.slane %v775, %v783
          %v787 = vadd.f32 %v771, %v780
          %v788 = vadd.f32 %v772, %v784
          %v789 = vadd.f32 %v773, %v780
          %v790 = vadd.f32 %v774, %v784
          %v791 = vadd.f32 %v787, %v761
          %v792 = vadd.f32 %v788, %v763
          %v793 = vadd.f32 %v789, %v767
          %v794 = vadd.f32 %v790, %v769
          %795 = vst [vmem:[%s355] sm:$0xff] %v791
          %796 = vst [vmem:[%s355 + $0x8] sm:$0xff] %v792
          %797 = vst [vmem:[%s355 + $0x10] sm:$0xff] %v793
          %798 = vst [vmem:[%s355 + $0x18] sm:$0xff] %v794
        $region72: #{tpu_custom_call.1} parent=39 // pred_fallthru
          _
        %s799 = sand.u32 %s187, 1
        %s800 = scalar_lea.sflag [#allocation5], %s799
        %s801 = sand.u32 %s187, 1
        %s802 = smul.addr %s801, 32
        %s803 = scalar_lea.vmem [#allocation11], %s802
        // Predicated region
        $region73: #{tpu_custom_call.1} parent=39 // pred_check
          %p804 = pneg %p197
        $region74: #{tpu_custom_call.1} parent=39 // pred_check_branch
          %806 = sbr.rel (%p804) target = $region76
        $region75: #{tpu_custom_call.1} parent=39 // pred_region
          %s807 = smul.u32 2, %s29
          %s808 = smul.u32 2, %s30
          %s810 = ssub.s32 512, 512
          %811 = vsyncadd %s800, %s810
          %s812 = smul.addr %s807, 2
          %s813 = sadd.s32 %s808, %s812
          %s814 = smul.addr %s813, 128
          %s815 = scalar_lea.hbm %s5, %s814
          %s816 = sshll.u32 %s803, 4
          %s817 = int_to_ptr.vmem [resolvable:$true] %s816
          %822 = dma.vmem_to_hbm [thread:$0]  %s817, 512, %s815, %s800, 256, 256, 16
        $region76: #{tpu_custom_call.1} parent=39 // pred_fallthru
          _
      $region40: #{tpu_custom_call.1} parent=5 // pred_fallthru
        _
      %p823 = scmp.le.s32.totalorder 2, %s19
      // Predicated region
      $region77: #{tpu_custom_call.1} parent=5 // pred_check
        %p824 = pneg %p823
      $region78: #{tpu_custom_call.1} parent=5 // pred_check_branch
        %826 = sbr.rel (%p824) target = $region80
      $region79: #{tpu_custom_call.1} parent=5 // pred_region
        %s827 = ssub.s32 %s19, 2
        // Predicated region
        $region81: #{tpu_custom_call.1} parent=79 // pred_check
          %p828 = pneg %p203
        $region82: #{tpu_custom_call.1} parent=79 // pred_check_branch
          %830 = sbr.rel (%p828) target = $region84
        $region83: #{tpu_custom_call.1} parent=79 // pred_region
          %s831 = sand.u32 %s188, 1
          %s832 = scalar_lea.sflag [#allocation5], %s831
          %s833 = sand.u32 %s188, 1
          %s834 = smul.addr %s833, 32
          %s835 = scalar_lea.vmem [#allocation11], %s834
          %836 = dma.done %s832, 512
        $region84: #{tpu_custom_call.1} parent=79 // pred_fallthru
          _
      $region80: #{tpu_custom_call.1} parent=5 // pred_fallthru
        _
    $region6: #{tpu_custom_call.1} parent=1 // loop_footer
      %s23 = sadd.s32 1, %s19
    $region7: #{tpu_custom_call.1} parent=1 // loop_footer_branch
      %18 = sbr.rel target = $region3
    $region8: #{tpu_custom_call.1} parent=1 // loop_exit
      _
    %837 = vsyncpa [#allocation4], 1
    %s838 = scalar_lea.sflag [#allocation4], 1
    %839 = vsyncpa %s838, 1
    %840 = vsyncpa [#allocation7], 1
    %841 = vsyncpa [#allocation10], 1
    %842 = vsyncpa [#allocation5], 1
    %s843 = scalar_lea.sflag [#allocation5], 1
    %844 = vsyncpa %s843, 1

</llo_original>
